<compile_context>
chip_gen: v7x
topology: tpu7x:2x2x1
jax: 0.10.0
libtpu: 0.0.40
codegen_flags: <defaults>
</compile_context>

<pallas_src>
import jax
import jax.numpy as jnp
from jax.experimental import pallas as pl
from jax.experimental.pallas import tpu as pltpu


def fused_concat_linear_kernel(ue_ref, me_ref, wu_ref, wm_ref, b_ref, o_ref):
    """cat([user_embed, movie_embed], dim=1) @ W.T + b for one batch tile.

    ue_ref, me_ref : (E, TB)  gathered embedding slabs, feature-major
    wu_ref, wm_ref : (E, 1)   user / movie halves of fc.weight.T (resident)
    b_ref          : (1,)     fc.bias in SMEM
    o_ref          : (1, TB)  lane-dense output row
    """
    ue = ue_ref[...].astype(jnp.float32)
    me = me_ref[...].astype(jnp.float32)
    wu = wu_ref[...].astype(jnp.float32)   # broadcasts over the TB lanes
    wm = wm_ref[...].astype(jnp.float32)
    prod = ue * wu + me * wm                         # (E, TB)  VPU
    acc = jnp.sum(prod, axis=0, keepdims=True)       # (1, TB)  sublane reduce (XLU)
    o_ref[...] = acc + b_ref[0]                      # lane-dense store


def recommender_forward(user, movie, user_emb, movie_emb, fc_w, fc_b, *, tile_b=128):
    """user, movie: int (B,) id vectors.
       user_emb: (num_users, E), movie_emb: (num_movies, E)
       fc_w: (1, 2E) [PyTorch nn.Linear layout], fc_b: (1,)
       Returns (B, 1) float32, matching RecommenderModel.forward."""
    B = user.shape[0]
    E = user_emb.shape[1]
    user = user.astype(jnp.int32)
    movie = movie.astype(jnp.int32)

    # Embedding lookup: one dense vectorized gather per table (XLA side).
    # TODO(synk): for tables that fit in VMEM, the gather could move in-kernel
    # (resident tables + jnp.take on the VMEM ref) to skip this HBM round trip.
    ue = jnp.take(user_emb, user, axis=0)     # (B, E)
    me = jnp.take(movie_emb, movie, axis=0)   # (B, E)

    # Pad the batch so tiles divide exactly (padded rows are sliced off below).
    num_tiles = pl.cdiv(B, tile_b)
    b_pad = num_tiles * tile_b
    if b_pad != B:
        pad = b_pad - B
        ue = jnp.pad(ue, ((0, pad), (0, 0)))
        me = jnp.pad(me, ((0, pad), (0, 0)))

    # Feature-major layout: features on sublanes, batch on lanes.
    ue_t = ue.T                              # (E, b_pad)
    me_t = me.T                              # (E, b_pad)

    w_t = fc_w.T                             # (2E, 1)
    wu = w_t[:E, :]                          # (E, 1) applied to user embedding
    wm = w_t[E:, :]                          # (E, 1) applied to movie embedding
    bias = fc_b.astype(jnp.float32).reshape(1)

    out_row = pl.pallas_call(
        fused_concat_linear_kernel,
        out_shape=jax.ShapeDtypeStruct((1, b_pad), jnp.float32),
        grid=(num_tiles,),
        in_specs=[
            pl.BlockSpec((E, tile_b), lambda i: (0, i)),        # user slab
            pl.BlockSpec((E, tile_b), lambda i: (0, i)),        # movie slab
            pl.BlockSpec((E, 1), lambda i: (0, 0)),             # Wu (resident)
            pl.BlockSpec((E, 1), lambda i: (0, 0)),             # Wm (resident)
            pl.BlockSpec(memory_space=pltpu.MemorySpace.SMEM),  # bias scalar
        ],
        out_specs=pl.BlockSpec((1, tile_b), lambda i: (0, i)),
        compiler_params=pltpu.CompilerParams(
            dimension_semantics=("parallel",)),
    )(ue_t, me_t, wu, wm, bias)

    return out_row[0, :B].reshape(B, 1)


if __name__ == "__main__":
    # Small shapes consistent with the module's forward.
    num_users, num_movies, embedding_size, batch = 32, 48, 16, 8

    key = jax.random.PRNGKey(0)
    k1, k2, k3, k4, k5, k6 = jax.random.split(key, 6)

    # Deterministic synthetic parameters (shapes from __init__).
    user_emb = jax.random.normal(k1, (num_users, embedding_size), jnp.float32)
    movie_emb = jax.random.normal(k2, (num_movies, embedding_size), jnp.float32)
    fc_w = jax.random.normal(k3, (1, 2 * embedding_size), jnp.float32) * 0.1
    fc_b = jax.random.normal(k4, (1,), jnp.float32)

    # Example inputs: integer id vectors, one id per example.
    user = jax.random.randint(k5, (batch,), 0, num_users, jnp.int32)
    movie = jax.random.randint(k6, (batch,), 0, num_movies, jnp.int32)

    out = recommender_forward(user, movie, user_emb, movie_emb, fc_w, fc_b)
    out = jax.block_until_ready(out)

    # Pure-JAX reference of the PyTorch forward for verification.
    x = jnp.concatenate([user_emb[user], movie_emb[movie]], axis=1)  # (B, 2E)
    ref = x @ fc_w.T + fc_b                                          # (B, 1)

    assert out.shape == (batch, 1), out.shape
    assert jnp.allclose(out, ref, atol=1e-5, rtol=1e-5), (out, ref)
    print("KERNEL_OK")
</pallas_src>

<mosaic_0001>
module attributes {stable_mosaic.version = 11 : i64} {
  func.func @fused_concat_linear_kernel(%arg0: i32, %arg1: memref<16x128xf32, #tpu.memory_space<vmem>>, %arg2: memref<16x128xf32, #tpu.memory_space<vmem>>, %arg3: memref<16x1xf32, #tpu.memory_space<vmem>>, %arg4: memref<16x1xf32, #tpu.memory_space<vmem>>, %arg5: memref<1xf32, #tpu.memory_space<smem>>, %arg6: memref<1x128xf32, #tpu.memory_space<vmem>>) attributes {dimension_semantics = [#tpu.dimension_semantics<parallel>], iteration_bounds = array<i64: 1>, scalar_prefetch = 0 : i64, scratch_operands = 0 : i64, tpu.core_type = #tpu.core_type<tc>, window_params = [{transform_indices = @transform_0, window_bounds = array<i64: 16, 128>}, {transform_indices = @transform_1, window_bounds = array<i64: 16, 128>}, {pipeline_mode = #tpu.pipeline_mode<synchronous>, transform_indices = @transform_2, window_bounds = array<i64: 16, 1>}, {pipeline_mode = #tpu.pipeline_mode<synchronous>, transform_indices = @transform_3, window_bounds = array<i64: 16, 1>}, {transform_indices = @transform_4, window_bounds = array<i64: 1>}, {transform_indices = @transform_5, window_bounds = array<i64: 1, 128>}]} {
    %c0 = arith.constant 0 : index
    %c0_0 = arith.constant 0 : index
    %0 = vector.load %arg1[%c0, %c0_0] : memref<16x128xf32, #tpu.memory_space<vmem>>, vector<16x128xf32>
    %c0_1 = arith.constant 0 : index
    %c0_2 = arith.constant 0 : index
    %1 = vector.load %arg2[%c0_1, %c0_2] : memref<16x128xf32, #tpu.memory_space<vmem>>, vector<16x128xf32>
    %c0_3 = arith.constant 0 : index
    %c0_4 = arith.constant 0 : index
    %2 = vector.load %arg3[%c0_3, %c0_4] : memref<16x1xf32, #tpu.memory_space<vmem>>, vector<16x1xf32>
    %c0_5 = arith.constant 0 : index
    %c0_6 = arith.constant 0 : index
    %3 = vector.load %arg4[%c0_5, %c0_6] : memref<16x1xf32, #tpu.memory_space<vmem>>, vector<16x1xf32>
    %4 = vector.broadcast %2 : vector<16x1xf32> to vector<16x128xf32>
    %5 = arith.mulf %0, %4 : vector<16x128xf32>
    %6 = vector.broadcast %3 : vector<16x1xf32> to vector<16x128xf32>
    %7 = arith.mulf %1, %6 : vector<16x128xf32>
    %8 = arith.addf %5, %7 : vector<16x128xf32>
    %cst = arith.constant dense<0.000000e+00> : vector<128xf32>
    %9 = vector.multi_reduction <add>, %8, %cst [0] : vector<16x128xf32> to vector<128xf32>
    %10 = vector.shape_cast %9 : vector<128xf32> to vector<1x128xf32>
    %c0_7 = arith.constant 0 : index
    %11 = memref.load %arg5[%c0_7] : memref<1xf32, #tpu.memory_space<smem>>
    %12 = vector.broadcast %11 : f32 to vector<1x128xf32>
    %13 = arith.addf %10, %12 : vector<1x128xf32>
    %c0_8 = arith.constant 0 : index
    %c0_9 = arith.constant 0 : index
    %14 = vector.load %arg6[%c0_8, %c0_9] : memref<1x128xf32, #tpu.memory_space<vmem>>, vector<1x128xf32>
    tpu.vector_store %arg6[%c0_8, %c0_9], %13 {strides = array<i32>} : memref<1x128xf32, #tpu.memory_space<vmem>>, vector<1x128xf32>,
    return
  }
  func.func @transform_0(%arg0: i32) -> (i32, i32) {
    %c0_i32 = arith.constant 0 : i32
    %c0_i32_0 = arith.constant 0 : i32
    return %c0_i32, %arg0 : i32, i32
  }
  func.func @transform_1(%arg0: i32) -> (i32, i32) {
    %c0_i32 = arith.constant 0 : i32
    %c0_i32_0 = arith.constant 0 : i32
    return %c0_i32, %arg0 : i32, i32
  }
  func.func @transform_2(%arg0: i32) -> (i32, i32) {
    %c0_i32 = arith.constant 0 : i32
    %c0_i32_0 = arith.constant 0 : i32
    %c0_i32_1 = arith.constant 0 : i32
    return %c0_i32, %c0_i32_0 : i32, i32
  }
  func.func @transform_3(%arg0: i32) -> (i32, i32) {
    %c0_i32 = arith.constant 0 : i32
    %c0_i32_0 = arith.constant 0 : i32
    %c0_i32_1 = arith.constant 0 : i32
    return %c0_i32, %c0_i32_0 : i32, i32
  }
  func.func @transform_4(%arg0: i32) -> i32 {
    %c0_i32 = arith.constant 0 : i32
    %c0_i32_0 = arith.constant 0 : i32
    return %c0_i32 : i32
  }
  func.func @transform_5(%arg0: i32) -> (i32, i32) {
    %c0_i32 = arith.constant 0 : i32
    %c0_i32_0 = arith.constant 0 : i32
    return %c0_i32, %arg0 : i32, i32
  }
}

</mosaic_0001>

<llo_original>
// kernel: tpu_custom_call.1
$region0: #{tpu_custom_call.1}
  #allocation0 [shape = 'u32[]', space=smem, size = 0x4, offset = 0x4, fixed_abs, tag = 'smem constant byte address 0x4 - core index']
  #allocation1 [shape = 'u32[144,128]{1,0:T(1,128)}', space=vmem, size = 0x12000, scoped, tag = 'internal scratch']
  #allocation2 [shape = 'f32[1]{0:T(128)S(6)}', space=smem, size = 0x200, scoped, tag = 'scoped memory for tpu_custom_call.1']
  %s0 = inlined_call_operand.vmem [shape: f32[16,128], index: 0, kind: input, shape index: {}]
  %s1 = inlined_call_operand.vmem [shape: f32[16,128], index: 1, kind: input, shape index: {}]
  %s2 = inlined_call_operand.vmem [shape: f32[16,1], index: 2, kind: input, shape index: {}]
  %s3 = inlined_call_operand.vmem [shape: f32[16,1], index: 3, kind: input, shape index: {}]
  %s4 = inlined_call_operand.<no memory space> [shape: f32[1], index: 4, kind: input, shape index: {}]
  %s5 = inlined_call_operand.hbm [shape: f32[1,128], index: 5, kind: output, shape index: {}]
  %s6 = sld [smem:[#allocation0]]
  $region30: #{tpu_custom_call.1} parent=0
    _
  %s8 = ssub.s32 1, %s6
  %s9 = scalar_select 0, %s8, %s6
  %10 = sst [smem:[#allocation2]] %s4
  $region1: #{tpu_custom_call.1} parent=0
    #allocation3 [shape = 'u8[512]{0}', space=vmem, size = 0x400, scoped, tag = 'output window, operand 0, single buffered']
    #allocation4 [shape = 's32[1]{0}', space=sflag, size = 0x4, scoped, tag = 'scoped memory for tpu_custom_call.1']
    %11 = vsyncpa [#allocation4], 0
    // Predicated region
    $region2: #{tpu_custom_call.1} parent=1 // pred_check
      _
    $region3: #{tpu_custom_call.1} parent=1 // pred_check_branch
      %13 = sbr.rel (0) target = $region5
    $region4: #{tpu_custom_call.1} parent=1 // pred_region
      _
    $region5: #{tpu_custom_call.1} parent=1 // pred_fallthru
      _
    // Predicated region
    $region6: #{tpu_custom_call.1} parent=1 // pred_check
      _
    $region7: #{tpu_custom_call.1} parent=1 // pred_check_branch
      %15 = sbr.rel (0) target = $region9
    $region8: #{tpu_custom_call.1} parent=1 // pred_region
      _
    $region9: #{tpu_custom_call.1} parent=1 // pred_fallthru
      _
    // Predicated region
    $region10: #{tpu_custom_call.1} parent=1 // pred_check
      _
    $region11: #{tpu_custom_call.1} parent=1 // pred_check_branch
      %17 = sbr.rel (0) target = $region13
    $region12: #{tpu_custom_call.1} parent=1 // pred_region
      _
    $region13: #{tpu_custom_call.1} parent=1 // pred_fallthru
      _
    // Predicated region
    $region14: #{tpu_custom_call.1} parent=1 // pred_check
      _
    $region15: #{tpu_custom_call.1} parent=1 // pred_check_branch
      %19 = sbr.rel (0) target = $region17
    $region16: #{tpu_custom_call.1} parent=1 // pred_region
      _
    $region17: #{tpu_custom_call.1} parent=1 // pred_fallthru
      _
    // Predicated region
    $region18: #{tpu_custom_call.1} parent=1 // pred_check
      _
    $region19: #{tpu_custom_call.1} parent=1 // pred_check_branch
      %21 = sbr.rel (0) target = $region21
    $region20: #{tpu_custom_call.1} parent=1 // pred_region
      _
    $region21: #{tpu_custom_call.1} parent=1 // pred_fallthru
      _
    %v22 = vld [vmem:[%s0] sm:$0xff]
    %v23 = vld [vmem:[%s0 + $0x8] sm:$0xff]
    %v24 = vld [vmem:[%s1] sm:$0xff]
    %v25 = vld [vmem:[%s1 + $0x8] sm:$0xff]
    %v26 = vld [vmem:[%s2] sm:$0xff]
    %v27 = vld [vmem:[%s2 + $0x8] sm:$0xff]
    %v28 = vld [vmem:[%s3] sm:$0xff]
    %v29 = vld [vmem:[%s3 + $0x8] sm:$0xff]
    %31 = vset.pattern.permute.xlu0 0
    %32 = vperm.xlu0 %31, %v26
    %v33 = vpop.permute.xlu0 %32
    %36 = vset.pattern.permute.xlu0 0
    %37 = vperm.xlu0 %36, %v27
    %v38 = vpop.permute.xlu0 %37
    %v40 = vmul.f32 %v22, %v33
    %v41 = vmul.f32 %v23, %v38
    %43 = vset.pattern.permute.xlu0 0
    %44 = vperm.xlu0 %43, %v28
    %v45 = vpop.permute.xlu0 %44
    %48 = vset.pattern.permute.xlu0 0
    %49 = vperm.xlu0 %48, %v29
    %v50 = vpop.permute.xlu0 %49
    %v52 = vmul.f32 %v24, %v45
    %v53 = vmul.f32 %v25, %v50
    %v54 = vadd.f32 %v40, %v52
    %v55 = vadd.f32 %v41, %v53
    %v56 = vadd.f32 %v54, %v55
    %v57 = vrot.slane %v56, 4
    %v58 = vadd.f32 %v56, %v57
    %v59 = vrot.slane %v58, 2
    %v60 = vadd.f32 %v58, %v59
    %v61 = vrot.slane %v60, 1
    %v62 = vadd.f32 %v60, %v61
    %s63 = sld [smem:[#allocation2]]
    %v64 = vstv %s63
    %v65 = vadd.f32 %v62, %v64
    %66 = vst [vmem:[#allocation3] sm:$0x1] %v65
    // Predicated region
    $region22: #{tpu_custom_call.1} parent=1 // pred_check
      _
    $region23: #{tpu_custom_call.1} parent=1 // pred_check_branch
      %68 = sbr.rel (0) target = $region25
    $region24: #{tpu_custom_call.1} parent=1 // pred_region
      %s70 = ssub.s32 16, 16
      %71 = vsyncadd [#allocation4], %s70
      %s73 = sshll.u32 [#allocation3], 4
      %s74 = int_to_ptr.vmem [resolvable:$true] %s73
      %76 = dma.vmem_to_hbm [thread:$0]  %s74, 16, %s5, [#allocation4]
    $region25: #{tpu_custom_call.1} parent=1 // pred_fallthru
      _
    // Predicated region
    $region26: #{tpu_custom_call.1} parent=1 // pred_check
      _
    $region27: #{tpu_custom_call.1} parent=1 // pred_check_branch
      %78 = sbr.rel (0) target = $region29
    $region28: #{tpu_custom_call.1} parent=1 // pred_region
      %79 = dma.done [#allocation4], 16
    $region29: #{tpu_custom_call.1} parent=1 // pred_fallthru
      _
    %80 = vsyncpa [#allocation4], 1

</llo_original>
